<compile_context>
chip_gen: v5e
topology: v5e:2x2
jax: 0.10.0
libtpu: 0.0.40
codegen_flags: <defaults>
</compile_context>

<pallas_src>
import functools

import jax
import jax.numpy as jnp
from jax import lax
from jax.experimental import pallas as pl
from jax.experimental.pallas import tpu as pltpu


def _vq_kernel(z_ref, w_ref, wwh_ref, q_ref, *, k_chunk, cross_dtype):
    """Quantize one tile of tokens (channel-major, tokens on the lane axis).

    z_ref:   (D, TN)  input activations for this (batch, token-tile) step
    w_ref:   (K, D)   codebook (resident across grid steps: constant index_map)
    wwh_ref: (K, 1)   0.5 * ||w||^2 per codebook row (hoisted to the wrapper)
    q_ref:   (D, TN)  quantized output
    """
    tn = z_ref.shape[1]
    k = w_ref.shape[0]
    n_chunks = k // k_chunk

    z_x = z_ref[...].astype(cross_dtype)             # (D, TN) cross operand

    best_score = None                                # (1, TN) running min score
    best_vec = None                                  # (D, TN) running best row

    for c in range(n_chunks):                        # static chunk loop
        lo, hi = c * k_chunk, (c + 1) * k_chunk
        w_c = w_ref[lo:hi, :]                        # (KC, D) f32 view
        wwh_c = wwh_ref[lo:hi, :]                    # (KC, 1) f32 view

        # score = 0.5*||w||^2 - w.z  (argmin-equivalent to mean((z-w)^2)).
        cross = lax.dot_general(
            w_c.astype(cross_dtype), z_x,
            (((1,), (0,)), ((), ())),
            preferred_element_type=jnp.float32)                       # (KC, TN)
        score = wwh_c - cross                                         # (KC, TN)

        # First-occurrence argmin within the chunk (torch.argmin tie rule).
        c_min = jnp.min(score, axis=0, keepdims=True)                 # (1, TN)
        row = lax.broadcasted_iota(jnp.int32, (k_chunk, tn), 0)       # (KC, TN)
        first = jnp.min(jnp.where(score == c_min, row, k_chunk),
                        axis=0, keepdims=True)                        # (1, TN)

        # Gather the chunk's winning rows via a one-hot matmul on the MXU.
        # Kept in f32 so the output is bit-exact codebook data.
        onehot = (row == first).astype(jnp.float32)                   # (KC, TN)
        cand = lax.dot_general(w_c, onehot, (((0,), (0,)), ((), ())),
                               preferred_element_type=jnp.float32)    # (D, TN)

        if c == 0:
            best_score, best_vec = c_min, cand
        else:
            take = c_min < best_score      # strict <: earlier chunk wins ties
            best_vec = jnp.where(take, cand, best_vec)
            best_score = jnp.minimum(c_min, best_score)

    q_ref[...] = best_vec.astype(q_ref.dtype)


def _pick_tile(hw, b, want):
    """Largest lane-dense divisor of hw <= want, with >=2 grid steps if possible."""
    tile = min(want, hw)
    if hw % tile != 0 or (tile % 128 != 0 and tile != hw):
        tile = hw
        for cand in range((min(want, hw) // 128) * 128, 0, -128):
            if hw % cand == 0:
                tile = cand
                break
    # v7x has 2 TensorCores per chip: guarantee at least 2 "parallel" steps.
    while b * (hw // tile) < 2 and tile % 256 == 0 and hw % (tile // 2) == 0:
        tile //= 2
    return tile


@functools.partial(jax.jit, static_argnames=("tile_hw", "k_chunk", "cross_dtype"))
def quantizer_forward(z_nchw, emb_table, tile_hw=1024, k_chunk=256,
                      cross_dtype=jnp.bfloat16):
    """Pallas implementation of Quantizer.forward.

    z_nchw:    (B, D, H, W) float32   (PyTorch NCHW convention)
    emb_table: (K, D)       float32   (nn.Embedding weight)
    returns:   (B, D, H, W) float32   quantized embeddings
    """
    b, d, h, w = z_nchw.shape
    k = emb_table.shape[0]
    hw = h * w

    tile = _pick_tile(hw, b, tile_hw)
    assert hw % tile == 0 and (tile % 128 == 0 or tile == hw)
    # TODO(synk): an H*W with no 128-multiple divisor falls back to one
    # full-extent tile; a pl.when-masked partial tile would handle that better.

    kc = k_chunk if (k > k_chunk and k % k_chunk == 0) else k

    # (B, D, H, W) -> (B, D, HW): free reshape (input is already channel-major).
    z_flat = z_nchw.reshape(b, d, hw)
    # Hoisted, halved codebook norms (folds the 2.0 scale out of the kernel).
    wwh = 0.5 * jnp.sum(emb_table.astype(jnp.float32) ** 2, axis=-1,
                        keepdims=True)

    grid = (b, hw // tile)

    # Right-sized VMEM budget: double-buffered z/q blocks + resident codebook
    # + norms + per-chunk temporaries, with headroom; capped at a v7x core.
    work = 4 * d * tile * 4                       # z + q blocks, double-buffered
    work += max(k, 8) * 128 * 4                   # (K, D) codebook, lane-padded
    work += max(k, 8) * 128 * 4                   # (K, 1) norms, lane-padded
    work += 3 * kc * tile * 4                     # per-chunk temporaries
    vmem_limit = int(min(64 << 20, max(32 << 20, 2 * work + (8 << 20))))

    flops = 2 * 2 * b * hw * k * d                # cross + one-hot gather matmuls
    bytes_accessed = (2 * b * d * hw + k * d + k) * 4
    cost = pl.CostEstimate(flops=flops, transcendentals=0,
                           bytes_accessed=bytes_accessed)

    kernel = functools.partial(_vq_kernel, k_chunk=kc, cross_dtype=cross_dtype)

    q_flat = pl.pallas_call(
        kernel,
        out_shape=jax.ShapeDtypeStruct((b, d, hw), z_nchw.dtype),
        grid_spec=pltpu.PrefetchScalarGridSpec(
            num_scalar_prefetch=0,
            grid=grid,
            in_specs=[
                pl.BlockSpec((pl.Squeezed(), d, tile),
                             lambda bi, ti: (bi, 0, ti)),      # z (lane-dense)
                pl.BlockSpec((k, d), lambda bi, ti: (0, 0)),   # resident codebook
                pl.BlockSpec((k, 1), lambda bi, ti: (0, 0)),   # resident norms
            ],
            out_specs=pl.BlockSpec((pl.Squeezed(), d, tile),
                                   lambda bi, ti: (bi, 0, ti)),
        ),
        compiler_params=pltpu.CompilerParams(
            dimension_semantics=("parallel", "parallel"),
            vmem_limit_bytes=vmem_limit),
        cost_estimate=cost,
    )(z_flat, emb_table, wwh)

    # (B, D, HW) -> (B, D, H, W): free reshape.
    return q_flat.reshape(b, d, h, w)


def quantizer_reference(z_nchw, emb_table):
    """Pure-JAX reference mirroring the torch code exactly (for validation)."""
    b, d, h, w = z_nchw.shape
    zt = jnp.transpose(z_nchw.reshape(b, d, h * w), (0, 2, 1)).reshape(-1, d)
    dist = jnp.mean((zt[:, None, :] - emb_table[None, :, :]) ** 2, axis=-1)
    ids = jnp.argmin(dist, axis=-1)
    q = emb_table[ids].reshape(b, h * w, d)
    return jnp.transpose(q, (0, 2, 1)).reshape(b, d, h, w)


if __name__ == "__main__":
    # Small deterministic config consistent with the module.
    B, EMB_DIM, H, W = 2, 32, 16, 16          # -> 256 tokens per batch element
    NUM_EMBEDDINGS = 64

    key = jax.random.PRNGKey(0)
    k_z, k_w = jax.random.split(key)
    z = jax.random.normal(k_z, (B, EMB_DIM, H, W), dtype=jnp.float32)
    # nn.Embedding default init: weight ~ N(0, 1)
    emb_table = jax.random.normal(k_w, (NUM_EMBEDDINGS, EMB_DIM),
                                  dtype=jnp.float32)

    out = jax.block_until_ready(quantizer_forward(z, emb_table))
    assert out.shape == (B, EMB_DIM, H, W)

    # --- validation (robust to bf16 near-tie argmin flips) ---
    z_tok = jnp.transpose(z.reshape(B, EMB_DIM, H * W), (0, 2, 1)).reshape(-1, EMB_DIM)
    q_tok = jnp.transpose(out.reshape(B, EMB_DIM, H * W), (0, 2, 1)).reshape(-1, EMB_DIM)

    # (1) every output token is (numerically) exactly a codebook row
    row_err = jnp.min(jnp.max(jnp.abs(q_tok[:, None, :] - emb_table[None, :, :]),
                              axis=-1), axis=-1)
    assert float(jnp.max(row_err)) < 1e-4, "output is not a codebook row"

    # (2) the selected row is (near-)optimal in mean-squared distance
    d_sel = jnp.mean((z_tok - q_tok) ** 2, axis=-1)
    d_min = jnp.min(jnp.mean((z_tok[:, None, :] - emb_table[None, :, :]) ** 2,
                             axis=-1), axis=-1)
    assert float(jnp.max(d_sel - d_min)) < 5e-2, "selected row is not near-optimal"

    # (3) the vast majority of tokens match the exact-f32 reference bit-for-bit
    ref = quantizer_reference(z, emb_table)
    tok_match = jnp.all(jnp.isclose(out, ref, atol=1e-5, rtol=0.0), axis=1)
    assert float(jnp.mean(tok_match)) > 0.95, "too many tokens disagree with reference"

    print("KERNEL_OK")
</pallas_src>

<mosaic_0001>
module attributes {stable_mosaic.version = 11 : i64} {
  func.func @_vq_kernel(%arg0: i32, %arg1: i32, %arg2: memref<1x32x256xf32, #tpu.memory_space<vmem>>, %arg3: memref<64x32xf32, #tpu.memory_space<vmem>>, %arg4: memref<64x1xf32, #tpu.memory_space<vmem>>, %arg5: memref<1x32x256xf32, #tpu.memory_space<vmem>>) attributes {dimension_semantics = [#tpu.dimension_semantics<parallel>, #tpu.dimension_semantics<parallel>], iteration_bounds = array<i64: 2, 1>, scalar_prefetch = 0 : i64, scratch_operands = 0 : i64, tpu.core_type = #tpu.core_type<tc>, window_params = [{transform_indices = @transform_0, window_bounds = array<i64: 1, 32, 256>}, {pipeline_mode = #tpu.pipeline_mode<synchronous>, transform_indices = @transform_1, window_bounds = array<i64: 64, 32>}, {pipeline_mode = #tpu.pipeline_mode<synchronous>, transform_indices = @transform_2, window_bounds = array<i64: 64, 1>}, {transform_indices = @transform_3, window_bounds = array<i64: 1, 32, 256>}]} {
    %c0 = arith.constant 0 : index
    %c0_0 = arith.constant 0 : index
    %c0_1 = arith.constant 0 : index
    %0 = vector.load %arg2[%c0, %c0_0, %c0_1] : memref<1x32x256xf32, #tpu.memory_space<vmem>>, vector<1x32x256xf32>
    %1 = vector.shape_cast %0 : vector<1x32x256xf32> to vector<32x256xf32>
    %2 = arith.truncf %1 : vector<32x256xf32> to vector<32x256xbf16>
    %c0_2 = arith.constant 0 : index
    %c0_3 = arith.constant 0 : index
    %3 = vector.load %arg3[%c0_2, %c0_3] : memref<64x32xf32, #tpu.memory_space<vmem>>, vector<64x32xf32>
    %c0_4 = arith.constant 0 : index
    %c0_5 = arith.constant 0 : index
    %4 = vector.load %arg4[%c0_4, %c0_5] : memref<64x1xf32, #tpu.memory_space<vmem>>, vector<64x1xf32>
    %5 = arith.truncf %3 : vector<64x32xf32> to vector<64x32xbf16>
    %cst = arith.constant dense<0.000000e+00> : vector<64x256xf32>
    %6 = tpu.matmul %5, %2, %cst {dimension_numbers = #tpu.dot_dimension_numbers<[1], [0], [0], [1], [0, 0, 1, 1], [], []>} : vector<64x32xbf16>, vector<32x256xbf16>, vector<64x256xf32> -> vector<64x256xf32>
    %7 = vector.broadcast %4 : vector<64x1xf32> to vector<64x256xf32>
    %8 = arith.subf %7, %6 : vector<64x256xf32>
    %cst_6 = arith.constant dense<0x7F800000> : vector<256xf32>
    %9 = vector.multi_reduction <minimumf>, %8, %cst_6 [0] : vector<64x256xf32> to vector<256xf32>
    %10 = vector.shape_cast %9 : vector<256xf32> to vector<1x256xf32>
    %11 = tpu.iota {dimensions = array<i32: 0>} : vector<64x256xi32>
    %12 = vector.broadcast %10 : vector<1x256xf32> to vector<64x256xf32>
    %13 = arith.cmpf oeq, %8, %12 : vector<64x256xf32>
    %c64_i32 = arith.constant 64 : i32
    %14 = vector.broadcast %c64_i32 : i32 to vector<64x256xi32>
    %15 = arith.select %13, %11, %14 : vector<64x256xi1>, vector<64x256xi32>
    %cst_7 = arith.constant dense<2147483647> : vector<256xi32>
    %16 = vector.multi_reduction <minsi>, %15, %cst_7 [0] : vector<64x256xi32> to vector<256xi32>
    %17 = vector.shape_cast %16 : vector<256xi32> to vector<1x256xi32>
    %18 = vector.broadcast %17 : vector<1x256xi32> to vector<64x256xi32>
    %19 = arith.cmpi eq, %11, %18 : vector<64x256xi32>
    %20 = arith.extui %19 : vector<64x256xi1> to vector<64x256xi32>
    %21 = arith.sitofp %20 : vector<64x256xi32> to vector<64x256xf32>
    %cst_8 = arith.constant dense<0.000000e+00> : vector<32x256xf32>
    %22 = tpu.matmul %3, %21, %cst_8 {dimension_numbers = #tpu.dot_dimension_numbers<[0], [0], [1], [1], [0, 1, 1, 1], [], []>} : vector<64x32xf32>, vector<64x256xf32>, vector<32x256xf32> -> vector<32x256xf32>
    %c0_9 = arith.constant 0 : index
    %c0_10 = arith.constant 0 : index
    %c0_11 = arith.constant 0 : index
    %23 = vector.load %arg5[%c0_9, %c0_10, %c0_11] : memref<1x32x256xf32, #tpu.memory_space<vmem>>, vector<1x32x256xf32>
    %24 = vector.shape_cast %23 : vector<1x32x256xf32> to vector<32x256xf32>
    %25 = vector.shape_cast %22 : vector<32x256xf32> to vector<1x32x256xf32>
    tpu.vector_store %arg5[%c0_9, %c0_10, %c0_11], %25 {strides = array<i32>} : memref<1x32x256xf32, #tpu.memory_space<vmem>>, vector<1x32x256xf32>,
    return
  }
  func.func @transform_0(%arg0: i32, %arg1: i32) -> (i32, i32, i32) {
    %c0_i32 = arith.constant 0 : i32
    %c0_i32_0 = arith.constant 0 : i32
    return %arg0, %c0_i32, %arg1 : i32, i32, i32
  }
  func.func @transform_1(%arg0: i32, %arg1: i32) -> (i32, i32) {
    %c0_i32 = arith.constant 0 : i32
    %c0_i32_0 = arith.constant 0 : i32
    %c0_i32_1 = arith.constant 0 : i32
    return %c0_i32, %c0_i32_0 : i32, i32
  }
  func.func @transform_2(%arg0: i32, %arg1: i32) -> (i32, i32) {
    %c0_i32 = arith.constant 0 : i32
    %c0_i32_0 = arith.constant 0 : i32
    %c0_i32_1 = arith.constant 0 : i32
    return %c0_i32, %c0_i32_0 : i32, i32
  }
  func.func @transform_3(%arg0: i32, %arg1: i32) -> (i32, i32, i32) {
    %c0_i32 = arith.constant 0 : i32
    %c0_i32_0 = arith.constant 0 : i32
    return %arg0, %c0_i32, %arg1 : i32, i32, i32
  }
}

</mosaic_0001>

<llo_original>
// kernel: quantizer_forward.1
$region0: #{quantizer_forward.1}
  #allocation0 [shape = 'u32[]', space=smem, size = 0x4, offset = 0x4, fixed_abs, tag = 'smem constant byte address 0x4 - core index']
  #allocation1 [shape = 'u32[72,128]{1,0:T(1,128)}', space=vmem, size = 0x9000, scoped, tag = 'internal scratch']
  %s0 = inlined_call_operand.vmem [shape: f32[2,32,256], index: 0, kind: input, shape index: {}]
  %s1 = inlined_call_operand.vmem [shape: f32[64,32], index: 1, kind: input, shape index: {}]
  %s2 = inlined_call_operand.vmem [shape: f32[64,1], index: 2, kind: input, shape index: {}]
  %s3 = inlined_call_operand.vmem [shape: f32[2,32,256], index: 3, kind: output, shape index: {}]
  %s4 = sld [smem:[#allocation0]]
  $region45: #{quantizer_forward.1} parent=0
    _
  %s6 = ssub.s32 1, %s4
  %s7 = scalar_select 0, %s6, %s4
  loop: start=0, step=1, limit=4
  $region2: #{quantizer_forward.1} parent=0 // loop_pre_header
    _
  $region3: #{quantizer_forward.1} parent=0 // loop_header
    %s9 = sphi 0, %s13
    %p10 = scmp.ge.s32.totalorder %s9, 4
    %s16 = sphi 0, %s28
    %s17 = sphi 0, %s24
    %s18 = sphi 0, %s16
    %s19 = sphi 0, %s17
    %s20 = sphi 0, %s18
    %s21 = sphi 0, %s19
    %s33 = sphi 0, %s35
    %s36 = sphi 0, %s33
    %s37 = sphi 0, %s36
    %s53 = sphi 0, %s37
    %s57 = sphi 0, %s57
    %s59 = sphi 0, %s57
    %s60 = sphi 0, %s59
    %s74 = sphi 0, %s60
    %s78 = sphi 0, %s78
    %s80 = sphi 0, %s78
    %s81 = sphi 0, %s80
    %s95 = sphi 0, %s81
    %s103 = sphi 0, %s105
    %s106 = sphi 0, %s103
    %s107 = sphi 0, %s106
    %s123 = sphi 0, %s107
  $region4: #{quantizer_forward.1} parent=0 // loop_header_branch
    %12 = sbr.rel (%p10) target = $region8
  $region5: #{quantizer_forward.1} parent=0 // loop_body
    %s14 = ssub.s32 %s9, 1
    %s15 = ssub.s32 %s9, 2
    %s22 = sadd.s32 1, %s17
    %p23 = scmp.ge.s32.totalorder %s22, 1
    %s24 = scalar_select %p23, 0, %s22
    %s25 = sadd.s32 1, %s16
    %s26 = scalar_select %p23, %s25, %s16
    %p27 = scmp.ge.s32.totalorder %s26, 2
    %s28 = scalar_select %p27, 0, %s26
    %s29 = ssub.s32 %s16, %s28
    %s30 = ssub.s32 %s17, %s24
    %s31 = sor.u32 %s29, %s30
    %p32 = scmp.eq.s32.totalorder %s31, 0
    %s34 = sadd.s32 %s33, 1
    %s35 = scalar_select %p32, %s33, %s34
    %p38 = pneg %p32
    %p39 = scmp.eq.s32.totalorder %s9, 1
    %p40 = por %p38, %p39
    %p41 = scmp.ne.s32.totalorder %s33, %s36
    %p42 = scmp.eq.s32.totalorder %s9, 0
    %p43 = por %p41, %p42
    %p44 = scmp.ne.s32.totalorder %s33, %s36
    %p45 = scmp.eq.s32.totalorder %s14, 1
    %p46 = por %p44, %p45
    %p47 = scmp.ne.s32.totalorder %s36, %s37
    %p48 = scmp.eq.s32.totalorder %s14, 0
    %p49 = por %p47, %p48
    %p50 = scmp.ne.s32.totalorder %s36, %s37
    %p51 = scmp.eq.s32.totalorder %s15, 1
    %p52 = por %p50, %p51
    %p54 = scmp.ne.s32.totalorder %s37, %s53
    %p55 = scmp.eq.s32.totalorder %s15, 0
    %p56 = por %p54, %p55
    %s58 = sadd.s32 %s57, 1
    %p61 = scmp.eq.s32.totalorder %s9, 1
    %p62 = scmp.ne.s32.totalorder %s57, %s59
    %p63 = scmp.eq.s32.totalorder %s9, 0
    %p64 = por %p62, %p63
    %p65 = scmp.ne.s32.totalorder %s57, %s59
    %p66 = scmp.eq.s32.totalorder %s14, 1
    %p67 = por %p65, %p66
    %p68 = scmp.ne.s32.totalorder %s59, %s60
    %p69 = scmp.eq.s32.totalorder %s14, 0
    %p70 = por %p68, %p69
    %p71 = scmp.ne.s32.totalorder %s59, %s60
    %p72 = scmp.eq.s32.totalorder %s15, 1
    %p73 = por %p71, %p72
    %p75 = scmp.ne.s32.totalorder %s60, %s74
    %p76 = scmp.eq.s32.totalorder %s15, 0
    %p77 = por %p75, %p76
    %s79 = sadd.s32 %s78, 1
    %p82 = scmp.eq.s32.totalorder %s9, 1
    %p83 = scmp.ne.s32.totalorder %s78, %s80
    %p84 = scmp.eq.s32.totalorder %s9, 0
    %p85 = por %p83, %p84
    %p86 = scmp.ne.s32.totalorder %s78, %s80
    %p87 = scmp.eq.s32.totalorder %s14, 1
    %p88 = por %p86, %p87
    %p89 = scmp.ne.s32.totalorder %s80, %s81
    %p90 = scmp.eq.s32.totalorder %s14, 0
    %p91 = por %p89, %p90
    %p92 = scmp.ne.s32.totalorder %s80, %s81
    %p93 = scmp.eq.s32.totalorder %s15, 1
    %p94 = por %p92, %p93
    %p96 = scmp.ne.s32.totalorder %s81, %s95
    %p97 = scmp.eq.s32.totalorder %s15, 0
    %p98 = por %p96, %p97
    %s99 = ssub.s32 %s16, %s28
    %s100 = ssub.s32 %s17, %s24
    %s101 = sor.u32 %s99, %s100
    %p102 = scmp.eq.s32.totalorder %s101, 0
    %s104 = sadd.s32 %s103, 1
    %s105 = scalar_select %p102, %s103, %s104
    %p108 = pneg %p102
    %p109 = scmp.eq.s32.totalorder %s9, 1
    %p110 = por %p108, %p109
    %p111 = scmp.ne.s32.totalorder %s103, %s106
    %p112 = scmp.eq.s32.totalorder %s9, 0
    %p113 = por %p111, %p112
    %p114 = scmp.ne.s32.totalorder %s103, %s106
    %p115 = scmp.eq.s32.totalorder %s14, 1
    %p116 = por %p114, %p115
    %p117 = scmp.ne.s32.totalorder %s106, %s107
    %p118 = scmp.eq.s32.totalorder %s14, 0
    %p119 = por %p117, %p118
    %p120 = scmp.ne.s32.totalorder %s106, %s107
    %p121 = scmp.eq.s32.totalorder %s15, 1
    %p122 = por %p120, %p121
    %p124 = scmp.ne.s32.totalorder %s107, %s123
    %p125 = scmp.eq.s32.totalorder %s15, 0
    %p126 = por %p124, %p125
    %p127 = scmp.le.s32.totalorder 1, %s9
    %p128 = scmp.lt.s32.totalorder %s9, 3
    %p129 = pnand %p127, %p128
    %p130 = pneg %p129
    // Predicated region
    $region9: #{quantizer_forward.1} parent=5 // pred_check
      _
    $region10: #{quantizer_forward.1} parent=5 // pred_check_branch
      %132 = sbr.rel (%p129) target = $region12
    $region11: #{quantizer_forward.1} parent=5 // pred_region
      %s133 = ssub.s32 %s9, 1
      // Predicated region
      $region13: #{quantizer_forward.1} parent=11 // pred_check
        %p134 = pneg %p70
      $region14: #{quantizer_forward.1} parent=11 // pred_check_branch
        %136 = sbr.rel (%p134) target = $region16
      $region15: #{quantizer_forward.1} parent=11 // pred_region
        _
      $region16: #{quantizer_forward.1} parent=11 // pred_fallthru
        _
      // Predicated region
      $region17: #{quantizer_forward.1} parent=11 // pred_check
        %p137 = pneg %p91
      $region18: #{quantizer_forward.1} parent=11 // pred_check_branch
        %139 = sbr.rel (%p137) target = $region20
      $region19: #{quantizer_forward.1} parent=11 // pred_region
        _
      $region20: #{quantizer_forward.1} parent=11 // pred_fallthru
        _
    $region12: #{quantizer_forward.1} parent=5 // pred_fallthru
      _
    %p140 = scmp.lt.s32.totalorder %s9, 2
    // Predicated region
    $region21: #{quantizer_forward.1} parent=5 // pred_check
      %p141 = pneg %p140
    $region22: #{quantizer_forward.1} parent=5 // pred_check_branch
      %143 = sbr.rel (%p141) target = $region24
    $region23: #{quantizer_forward.1} parent=5 // pred_region
      // Predicated region
      $region25: #{quantizer_forward.1} parent=23 // pred_check
        %p144 = pneg %p43
      $region26: #{quantizer_forward.1} parent=23 // pred_check_branch
        %146 = sbr.rel (%p144) target = $region28
      $region27: #{quantizer_forward.1} parent=23 // pred_region
        %s147 = smul.u32 2, %s17
        %p148 = scmp.lt.s32.totalorder %s16, 1
        %s149 = scalar_select %p148, %s16, 1
        %p150 = scmp.lt.s32.totalorder %s147, 1
        %s151 = scalar_select %p150, %s147, 1
        %s152 = smul.addr %s149, 8
        %s153 = sadd.s32 %s151, %s152
        %s154 = smul.addr %s153, 8
        %s155 = scalar_lea.vmem %s0, %s154
        %s156 = smul.u32 2, %s17
      $region28: #{quantizer_forward.1} parent=23 // pred_fallthru
        _
    $region24: #{quantizer_forward.1} parent=5 // pred_fallthru
      _
    %p157 = scmp.le.s32.totalorder 1, %s9
    %p158 = scmp.lt.s32.totalorder %s9, 3
    %p159 = pnand %p157, %p158
    %p160 = pneg %p159
    // Predicated region
    $region29: #{quantizer_forward.1} parent=5 // pred_check
      _
    $region30: #{quantizer_forward.1} parent=5 // pred_check_branch
      %162 = sbr.rel (%p159) target = $region32
    $region31: #{quantizer_forward.1} parent=5 // pred_region
      %s163 = ssub.s32 %s9, 1
      %s164 = smul.u32 2, %s19
      %p165 = scmp.lt.s32.totalorder %s18, 1
      %s166 = scalar_select %p165, %s18, 1
      %p167 = scmp.lt.s32.totalorder %s164, 1
      %s168 = scalar_select %p167, %s164, 1
      %s169 = smul.addr %s166, 8
      %s170 = sadd.s32 %s168, %s169
      %s171 = smul.addr %s170, 8
      %s172 = scalar_lea.vmem %s0, %s171
      %p173 = pneg %p49
      %p174 = pneg %p46
      %p175 = pneg %p70
      %p176 = pneg %p67
      %p177 = pneg %p91
      %p178 = pneg %p88
      %p179 = pneg %p119
      %p180 = pneg %p116
      %s181 = smul.u32 2, %s19
      %p182 = scmp.lt.s32.totalorder %s18, 1
      %s183 = scalar_select %p182, %s18, 1
      %p184 = scmp.lt.s32.totalorder %s181, 1
      %s185 = scalar_select %p184, %s181, 1
      %s186 = smul.addr %s183, 8
      %s187 = sadd.s32 %s185, %s186
      %s188 = smul.addr %s187, 8
      %s189 = scalar_lea.vmem %s3, %s188
      %s190 = smul.u32 2, %s19
      %p191 = scmp.lt.s32.totalorder %s18, 1
      %s192 = scalar_select %p191, %s18, 1
      %p193 = scmp.lt.s32.totalorder %s190, 1
      %s194 = scalar_select %p193, %s190, 1
      %s195 = smul.addr %s192, 8
      %s196 = sadd.s32 %s194, %s195
      %s197 = smul.addr %s196, 8
      %s198 = scalar_lea.vmem %s0, %s197
      %s199 = smul.u32 2, %s19
      %s200 = smul.u32 2, %s19
      %p201 = scmp.lt.s32.totalorder %s18, 1
      %s202 = scalar_select %p201, %s18, 1
      %p203 = scmp.lt.s32.totalorder %s200, 1
      %s204 = scalar_select %p203, %s200, 1
      %s205 = smul.addr %s202, 8
      %s206 = sadd.s32 %s204, %s205
      %s207 = smul.addr %s206, 8
      %s208 = scalar_lea.vmem %s3, %s207
      %s209 = smul.u32 2, %s19
      %v211 = vld [vmem:[%s198] sm:$0xff]
      %v212 = vld [vmem:[%s198 + $0x8] sm:$0xff]
      %v213 = vld [vmem:[%s198 + $0x10] sm:$0xff]
      %v214 = vld [vmem:[%s198 + $0x18] sm:$0xff]
      %v215 = vld [vmem:[%s198 + $0x20] sm:$0xff]
      %v216 = vld [vmem:[%s198 + $0x28] sm:$0xff]
      %v217 = vld [vmem:[%s198 + $0x30] sm:$0xff]
      %v218 = vld [vmem:[%s198 + $0x38] sm:$0xff]
      %v219 = vpack.c.bf16 %v213, %v211
      %v220 = vpack.c.bf16 %v214, %v212
      %v221 = vpack.c.bf16 %v217, %v215
      %v222 = vpack.c.bf16 %v218, %v216
      %v223 = vld [vmem:[%s1] sm:$0xff]
      %v224 = vld [vmem:[%s1 + $0x8] sm:$0xff]
      %v225 = vld [vmem:[%s1 + $0x10] sm:$0xff]
      %v226 = vld [vmem:[%s1 + $0x18] sm:$0xff]
      %v227 = vld [vmem:[%s1 + $0x20] sm:$0xff]
      %v228 = vld [vmem:[%s1 + $0x28] sm:$0xff]
      %v229 = vld [vmem:[%s1 + $0x30] sm:$0xff]
      %v230 = vld [vmem:[%s1 + $0x38] sm:$0xff]
      %v231 = vld [vmem:[%s2] sm:$0xff]
      %v232 = vld [vmem:[%s2 + $0x8] sm:$0xff]
      %v233 = vld [vmem:[%s2 + $0x10] sm:$0xff]
      %v234 = vld [vmem:[%s2 + $0x18] sm:$0xff]
      %v235 = vld [vmem:[%s2 + $0x20] sm:$0xff]
      %v236 = vld [vmem:[%s2 + $0x28] sm:$0xff]
      %v237 = vld [vmem:[%s2 + $0x30] sm:$0xff]
      %v238 = vld [vmem:[%s2 + $0x38] sm:$0xff]
      %v239 = vpack.c.bf16 %v224, %v223
      %v240 = vpack.c.bf16 %v226, %v225
      %v241 = vpack.c.bf16 %v228, %v227
      %v242 = vpack.c.bf16 %v230, %v229
      %vm243 = vcmask 261120
      %v245 = vsel %vm243, %v239, 0
      %v248 = vsel %vm243, %v240, 0
      %v251 = vsel %vm243, %v241, 0
      %v254 = vsel %vm243, %v242, 0
      %256 = vmatpush.bf16.msra.mxu0 0
      %257 = vmatpush.bf16.msra.mxu0 0
      %258 = vmatpush.bf16.msra.mxu0 0
      %259 = vmatpush.bf16.msra.mxu0 0
      %260 = vmatpush.bf16.msra.mxu0 0
      %261 = vmatpush.bf16.msra.mxu0 0
      %262 = vmatpush.bf16.msra.mxu0 %v221
      %263 = vmatpush.bf16.msra.mxu0 %v219
      %264 = vmatmul.bf16.gmra.mxu0 %v245
      %v265 = vpop.f32.mrf.mxu0
      %v266 = vadd.f32 0.0, %v265
      %v267 = vpop.f32.mrf.mxu0
      %v268 = vadd.f32 0.0, %v267
      %269 = vmatmul.bf16.gmra.mxu0 %v248
      %v270 = vpop.f32.mrf.mxu0
      %v271 = vadd.f32 0.0, %v270
      %v272 = vpop.f32.mrf.mxu0
      %v273 = vadd.f32 0.0, %v272
      %274 = vmatmul.bf16.gmra.mxu0 %v251
      %v275 = vpop.f32.mrf.mxu0
      %v276 = vadd.f32 0.0, %v275
      %v277 = vpop.f32.mrf.mxu0
      %v278 = vadd.f32 0.0, %v277
      %279 = vmatmul.bf16.gmra.mxu0 %v254
      %v280 = vpop.f32.mrf.mxu0
      %v281 = vadd.f32 0.0, %v280
      %v282 = vpop.f32.mrf.mxu0
      %v283 = vadd.f32 0.0, %v282
      %284 = vdwg.mxu0
      %285 = vmatpush.bf16.msra.mxu0 0
      %286 = vmatpush.bf16.msra.mxu0 0
      %287 = vmatpush.bf16.msra.mxu0 0
      %288 = vmatpush.bf16.msra.mxu0 0
      %289 = vmatpush.bf16.msra.mxu0 0
      %290 = vmatpush.bf16.msra.mxu0 0
      %291 = vmatpush.bf16.msra.mxu0 %v222
      %292 = vmatpush.bf16.msra.mxu0 %v220
      %293 = vmatmul.bf16.gmra.mxu0 %v245
      %v294 = vpop.f32.mrf.mxu0
      %v295 = vadd.f32 0.0, %v294
      %v296 = vpop.f32.mrf.mxu0
      %v297 = vadd.f32 0.0, %v296
      %298 = vmatmul.bf16.gmra.mxu0 %v248
      %v299 = vpop.f32.mrf.mxu0
      %v300 = vadd.f32 0.0, %v299
      %v301 = vpop.f32.mrf.mxu0
      %v302 = vadd.f32 0.0, %v301
      %303 = vmatmul.bf16.gmra.mxu0 %v251
      %v304 = vpop.f32.mrf.mxu0
      %v305 = vadd.f32 0.0, %v304
      %v306 = vpop.f32.mrf.mxu0
      %v307 = vadd.f32 0.0, %v306
      %308 = vmatmul.bf16.gmra.mxu0 %v254
      %v309 = vpop.f32.mrf.mxu0
      %v310 = vadd.f32 0.0, %v309
      %v311 = vpop.f32.mrf.mxu0
      %v312 = vadd.f32 0.0, %v311
      %313 = vdwg.mxu0
      %315 = vset.pattern.permute.xlu0 0
      %316 = vperm.xlu0 %315, %v231
      %v317 = vpop.permute.xlu0 %316
      %320 = vset.pattern.permute.xlu0 0
      %321 = vperm.xlu0 %320, %v232
      %v322 = vpop.permute.xlu0 %321
      %325 = vset.pattern.permute.xlu0 0
      %326 = vperm.xlu0 %325, %v233
      %v327 = vpop.permute.xlu0 %326
      %330 = vset.pattern.permute.xlu0 0
      %331 = vperm.xlu0 %330, %v234
      %v332 = vpop.permute.xlu0 %331
      %335 = vset.pattern.permute.xlu0 0
      %336 = vperm.xlu0 %335, %v235
      %v337 = vpop.permute.xlu0 %336
      %340 = vset.pattern.permute.xlu0 0
      %341 = vperm.xlu0 %340, %v236
      %v342 = vpop.permute.xlu0 %341
      %345 = vset.pattern.permute.xlu0 0
      %346 = vperm.xlu0 %345, %v237
      %v347 = vpop.permute.xlu0 %346
      %350 = vset.pattern.permute.xlu0 0
      %351 = vperm.xlu0 %350, %v238
      %v352 = vpop.permute.xlu0 %351
      %v354 = vsub.f32 %v317, %v266
      %v355 = vsub.f32 %v317, %v295
      %v356 = vsub.f32 %v322, %v268
      %v357 = vsub.f32 %v322, %v297
      %v358 = vsub.f32 %v327, %v271
      %v359 = vsub.f32 %v327, %v300
      %v360 = vsub.f32 %v332, %v273
      %v361 = vsub.f32 %v332, %v302
      %v362 = vsub.f32 %v337, %v276
      %v363 = vsub.f32 %v337, %v305
      %v364 = vsub.f32 %v342, %v278
      %v365 = vsub.f32 %v342, %v307
      %v366 = vsub.f32 %v347, %v281
      %v367 = vsub.f32 %v347, %v310
      %v368 = vsub.f32 %v352, %v283
      %v369 = vsub.f32 %v352, %v312
      %v370 = vmin.f32 %v354, %v358
      %v371 = vmin.f32 %v356, %v360
      %v372 = vmin.f32 %v370, %v362
      %v373 = vmin.f32 %v371, %v364
      %v374 = vmin.f32 %v372, %v366
      %v375 = vmin.f32 %v373, %v368
      %v376 = vmin.f32 %v374, %v375
      %v377 = vrot.slane %v376, 4
      %v378 = vmin.f32 %v376, %v377
      %v379 = vrot.slane %v378, 2
      %v380 = vmin.f32 %v378, %v379
      %v381 = vrot.slane %v380, 1
      %v382 = vmin.f32 %v380, %v381
      %v383 = vmin.f32 %v355, %v359
      %v384 = vmin.f32 %v357, %v361
      %v385 = vmin.f32 %v383, %v363
      %v386 = vmin.f32 %v384, %v365
      %v387 = vmin.f32 %v385, %v367
      %v388 = vmin.f32 %v386, %v369
      %v389 = vmin.f32 %v387, %v388
      %v390 = vrot.slane %v389, 4
      %v391 = vmin.f32 %v389, %v390
      %v392 = vrot.slane %v391, 2
      %v393 = vmin.f32 %v391, %v392
      %v394 = vrot.slane %v393, 1
      %v395 = vmin.f32 %v393, %v394
      %v396 = vlaneseq
      %v397 = vshrl.u32 %v396, 7
      %v398 = vadd.s32 %v397, 8
      %v399 = vadd.s32 %v397, 16
      %v400 = vadd.s32 %v397, 24
      %v401 = vadd.s32 %v397, 32
      %v402 = vadd.s32 %v397, 40
      %v403 = vadd.s32 %v397, 48
      %v404 = vadd.s32 %v397, 56
      %vm405 = vcmp.eq.f32.partialorder %v354, %v382
      %vm406 = vcmp.eq.f32.partialorder %v355, %v395
      %vm407 = vcmp.eq.f32.partialorder %v356, %v382
      %vm408 = vcmp.eq.f32.partialorder %v357, %v395
      %vm409 = vcmp.eq.f32.partialorder %v358, %v382
      %vm410 = vcmp.eq.f32.partialorder %v359, %v395
      %vm411 = vcmp.eq.f32.partialorder %v360, %v382
      %vm412 = vcmp.eq.f32.partialorder %v361, %v395
      %vm413 = vcmp.eq.f32.partialorder %v362, %v382
      %vm414 = vcmp.eq.f32.partialorder %v363, %v395
      %vm415 = vcmp.eq.f32.partialorder %v364, %v382
      %vm416 = vcmp.eq.f32.partialorder %v365, %v395
      %vm417 = vcmp.eq.f32.partialorder %v366, %v382
      %vm418 = vcmp.eq.f32.partialorder %v367, %v395
      %vm419 = vcmp.eq.f32.partialorder %v368, %v382
      %vm420 = vcmp.eq.f32.partialorder %v369, %v395
      %v421 = vsel %vm405, %v397, 64
      %v422 = vsel %vm406, %v397, 64
      %v423 = vsel %vm407, %v398, 64
      %v424 = vsel %vm408, %v398, 64
      %v425 = vsel %vm409, %v399, 64
      %v426 = vsel %vm410, %v399, 64
      %v427 = vsel %vm411, %v400, 64
      %v428 = vsel %vm412, %v400, 64
      %v429 = vsel %vm413, %v401, 64
      %v430 = vsel %vm414, %v401, 64
      %v431 = vsel %vm415, %v402, 64
      %v432 = vsel %vm416, %v402, 64
      %v433 = vsel %vm417, %v403, 64
      %v434 = vsel %vm418, %v403, 64
      %v435 = vsel %vm419, %v404, 64
      %v436 = vsel %vm420, %v404, 64
      %vm437 = vcmp.lt.s32.totalorder %v421, %v425
      %v438 = vsel %vm437, %v421, %v425
      %vm439 = vcmp.lt.s32.totalorder %v423, %v427
      %v440 = vsel %vm439, %v423, %v427
      %vm441 = vcmp.lt.s32.totalorder %v438, %v429
      %v442 = vsel %vm441, %v438, %v429
      %vm443 = vcmp.lt.s32.totalorder %v440, %v431
      %v444 = vsel %vm443, %v440, %v431
      %vm445 = vcmp.lt.s32.totalorder %v442, %v433
      %v446 = vsel %vm445, %v442, %v433
      %vm447 = vcmp.lt.s32.totalorder %v444, %v435
      %v448 = vsel %vm447, %v444, %v435
      %vm449 = vcmp.lt.s32.totalorder %v446, %v448
      %v450 = vsel %vm449, %v446, %v448
      %v451 = vrot.slane %v450, 4
      %vm452 = vcmp.lt.s32.totalorder %v450, %v451
      %v453 = vsel %vm452, %v450, %v451
      %v454 = vrot.slane %v453, 2
      %vm455 = vcmp.lt.s32.totalorder %v453, %v454
      %v456 = vsel %vm455, %v453, %v454
      %v457 = vrot.slane %v456, 1
      %vm458 = vcmp.lt.s32.totalorder %v456, %v457
      %v459 = vsel %vm458, %v456, %v457
      %vm460 = vcmp.lt.s32.totalorder %v422, %v426
      %v461 = vsel %vm460, %v422, %v426
      %vm462 = vcmp.lt.s32.totalorder %v424, %v428
      %v463 = vsel %vm462, %v424, %v428
      %vm464 = vcmp.lt.s32.totalorder %v461, %v430
      %v465 = vsel %vm464, %v461, %v430
      %vm466 = vcmp.lt.s32.totalorder %v463, %v432
      %v467 = vsel %vm466, %v463, %v432
      %vm468 = vcmp.lt.s32.totalorder %v465, %v434
      %v469 = vsel %vm468, %v465, %v434
      %vm470 = vcmp.lt.s32.totalorder %v467, %v436
      %v471 = vsel %vm470, %v467, %v436
      %vm472 = vcmp.lt.s32.totalorder %v469, %v471
      %v473 = vsel %vm472, %v469, %v471
      %v474 = vrot.slane %v473, 4
      %vm475 = vcmp.lt.s32.totalorder %v473, %v474
      %v476 = vsel %vm475, %v473, %v474
      %v477 = vrot.slane %v476, 2
      %vm478 = vcmp.lt.s32.totalorder %v476, %v477
      %v479 = vsel %vm478, %v476, %v477
      %v480 = vrot.slane %v479, 1
      %vm481 = vcmp.lt.s32.totalorder %v479, %v480
      %v482 = vsel %vm481, %v479, %v480
      %vm483 = vcmp.eq.s32.totalorder %v397, %v459
      %vm484 = vcmp.eq.s32.totalorder %v397, %v482
      %vm485 = vcmp.eq.s32.totalorder %v398, %v459
      %vm486 = vcmp.eq.s32.totalorder %v398, %v482
      %vm487 = vcmp.eq.s32.totalorder %v399, %v459
      %vm488 = vcmp.eq.s32.totalorder %v399, %v482
      %vm489 = vcmp.eq.s32.totalorder %v400, %v459
      %vm490 = vcmp.eq.s32.totalorder %v400, %v482
      %vm491 = vcmp.eq.s32.totalorder %v401, %v459
      %vm492 = vcmp.eq.s32.totalorder %v401, %v482
      %vm493 = vcmp.eq.s32.totalorder %v402, %v459
      %vm494 = vcmp.eq.s32.totalorder %v402, %v482
      %vm495 = vcmp.eq.s32.totalorder %v403, %v459
      %vm496 = vcmp.eq.s32.totalorder %v403, %v482
      %vm497 = vcmp.eq.s32.totalorder %v404, %v459
      %vm498 = vcmp.eq.s32.totalorder %v404, %v482
      %v499 = vsel %vm483, 1, 0
      %v500 = vsel %vm484, 1, 0
      %v501 = vsel %vm485, 1, 0
      %v502 = vsel %vm486, 1, 0
      %v503 = vsel %vm487, 1, 0
      %v504 = vsel %vm488, 1, 0
      %v505 = vsel %vm489, 1, 0
      %v506 = vsel %vm490, 1, 0
      %v507 = vsel %vm491, 1, 0
      %v508 = vsel %vm492, 1, 0
      %v509 = vsel %vm493, 1, 0
      %v510 = vsel %vm494, 1, 0
      %v511 = vsel %vm495, 1, 0
      %v512 = vsel %vm496, 1, 0
      %v513 = vsel %vm497, 1, 0
      %v514 = vsel %vm498, 1, 0
      %v515 = vcvt.s32.f32 %v499
      %v516 = vcvt.s32.f32 %v500
      %v517 = vcvt.s32.f32 %v501
      %v518 = vcvt.s32.f32 %v502
      %v519 = vcvt.s32.f32 %v503
      %v520 = vcvt.s32.f32 %v504
      %v521 = vcvt.s32.f32 %v505
      %v522 = vcvt.s32.f32 %v506
      %v523 = vcvt.s32.f32 %v507
      %v524 = vcvt.s32.f32 %v508
      %v525 = vcvt.s32.f32 %v509
      %v526 = vcvt.s32.f32 %v510
      %v527 = vcvt.s32.f32 %v511
      %v528 = vcvt.s32.f32 %v512
      %v529 = vcvt.s32.f32 %v513
      %v530 = vcvt.s32.f32 %v514
      %531 = vxpose.xlu0.b32.start [1/16] %v223, 128
      %532 = vxpose.xlu0.b32.cont [2/16] %v224, 128
      %533 = vxpose.xlu0.b32.cont [3/16] %v225, 128
      %534 = vxpose.xlu0.b32.cont [4/16] %v226, 128
      %535 = vxpose.xlu0.b32.cont [5/16] %v227, 128
      %536 = vxpose.xlu0.b32.cont [6/16] %v228, 128
      %537 = vxpose.xlu0.b32.cont [7/16] %v229, 128
      %538 = vxpose.xlu0.b32.cont [8/16] %v230, 128
      %539 = vxpose.xlu0.b32.cont [9/16] 0.0, 128
      %540 = vxpose.xlu0.b32.cont [10/16] 0.0, 128
      %541 = vxpose.xlu0.b32.cont [11/16] 0.0, 128
      %542 = vxpose.xlu0.b32.cont [12/16] 0.0, 128
      %543 = vxpose.xlu0.b32.cont [13/16] 0.0, 128
      %544 = vxpose.xlu0.b32.cont [14/16] 0.0, 128
      %545 = vxpose.xlu0.b32.cont [15/16] 0.0, 128
      %546 = vxpose.xlu0.b32.end [16/16] 0.0, 128
      %v547 = vpop.trf.xlu0
      %v548 = vpop.trf.xlu0
      %v549 = vpop.trf.xlu0
      %v550 = vpop.trf.xlu0
      %v551 = vpop.trf.xlu0
      %v552 = vpop.trf.xlu0
      %v553 = vpop.trf.xlu0
      %v554 = vpop.trf.xlu0
      %v555 = vpop.trf.xlu0
      %v556 = vpop.trf.xlu0
      %v557 = vpop.trf.xlu0
      %v558 = vpop.trf.xlu0
      %v559 = vpop.trf.xlu0
      %v560 = vpop.trf.xlu0
      %v561 = vpop.trf.xlu0
      %v562 = vpop.trf.xlu0
      %vm563 = vcmask 523264
      %v565 = vsel %vm563, %v547, 0
      %v568 = vsel %vm563, %v548, 0
      %v571 = vsel %vm563, %v549, 0
      %v574 = vsel %vm563, %v550, 0
      %576 = vmatpush.msra.mxu0 0.0
      %577 = vmatpush.msra.mxu0 0.0
      %578 = vmatpush.msra.mxu0 0.0
      %579 = vmatpush.msra.mxu0 0.0
      %580 = vmatpush.msra.mxu0 0.0
      %581 = vmatpush.msra.mxu0 0.0
      %582 = vmatpush.msra.mxu0 0.0
      %583 = vmatpush.msra.mxu0 0.0
      %584 = vmatpush.msra.mxu0 %v529
      %585 = vmatpush.msra.mxu0 %v527
      %586 = vmatpush.msra.mxu0 %v525
      %587 = vmatpush.msra.mxu0 %v523
      %588 = vmatpush.msra.mxu0 %v521
      %589 = vmatpush.msra.mxu0 %v519
      %590 = vmatpush.msra.mxu0 %v517
      %591 = vmatpush.msra.mxu0 %v515
      %592 = vmatmul.f32.gmra.mxu0 %v565
      %v593 = vpop.f32.mrf.mxu0
      %v594 = vadd.f32 0.0, %v593
      %595 = vmatmul.f32.gmra.mxu0 %v568
      %v596 = vpop.f32.mrf.mxu0
      %v597 = vadd.f32 0.0, %v596
      %598 = vmatmul.f32.gmra.mxu0 %v571
      %v599 = vpop.f32.mrf.mxu0
      %v600 = vadd.f32 0.0, %v599
      %601 = vmatmul.f32.gmra.mxu0 %v574
      %v602 = vpop.f32.mrf.mxu0
      %v603 = vadd.f32 0.0, %v602
      %604 = vdwg.mxu0
      %605 = vmatpush.msra.mxu0 0.0
      %606 = vmatpush.msra.mxu0 0.0
      %607 = vmatpush.msra.mxu0 0.0
      %608 = vmatpush.msra.mxu0 0.0
      %609 = vmatpush.msra.mxu0 0.0
      %610 = vmatpush.msra.mxu0 0.0
      %611 = vmatpush.msra.mxu0 0.0
      %612 = vmatpush.msra.mxu0 0.0
      %613 = vmatpush.msra.mxu0 %v530
      %614 = vmatpush.msra.mxu0 %v528
      %615 = vmatpush.msra.mxu0 %v526
      %616 = vmatpush.msra.mxu0 %v524
      %617 = vmatpush.msra.mxu0 %v522
      %618 = vmatpush.msra.mxu0 %v520
      %619 = vmatpush.msra.mxu0 %v518
      %620 = vmatpush.msra.mxu0 %v516
      %621 = vmatmul.f32.gmra.mxu0 %v565
      %v622 = vpop.f32.mrf.mxu0
      %v623 = vadd.f32 0.0, %v622
      %624 = vmatmul.f32.gmra.mxu0 %v568
      %v625 = vpop.f32.mrf.mxu0
      %v626 = vadd.f32 0.0, %v625
      %627 = vmatmul.f32.gmra.mxu0 %v571
      %v628 = vpop.f32.mrf.mxu0
      %v629 = vadd.f32 0.0, %v628
      %630 = vmatmul.f32.gmra.mxu0 %v574
      %v631 = vpop.f32.mrf.mxu0
      %v632 = vadd.f32 0.0, %v631
      %633 = vdwg.mxu0
      %634 = vst [vmem:[%s208] sm:$0xff] %v594
      %635 = vst [vmem:[%s208 + $0x8] sm:$0xff] %v623
      %636 = vst [vmem:[%s208 + $0x10] sm:$0xff] %v597
      %637 = vst [vmem:[%s208 + $0x18] sm:$0xff] %v626
      %638 = vst [vmem:[%s208 + $0x20] sm:$0xff] %v600
      %639 = vst [vmem:[%s208 + $0x28] sm:$0xff] %v629
      %640 = vst [vmem:[%s208 + $0x30] sm:$0xff] %v603
      %641 = vst [vmem:[%s208 + $0x38] sm:$0xff] %v632
      %s642 = smul.u32 2, %s19
      %p643 = scmp.lt.s32.totalorder %s18, 1
      %s644 = scalar_select %p643, %s18, 1
      %p645 = scmp.lt.s32.totalorder %s642, 1
      %s646 = scalar_select %p645, %s642, 1
      %s647 = smul.addr %s644, 8
      %s648 = sadd.s32 %s646, %s647
      %s649 = smul.addr %s648, 8
      %s650 = scalar_lea.vmem %s3, %s649
      // Predicated region
      $region33: #{quantizer_forward.1} parent=31 // pred_check
        %p651 = pneg %p116
      $region34: #{quantizer_forward.1} parent=31 // pred_check_branch
        %653 = sbr.rel (%p651) target = $region36
      $region35: #{quantizer_forward.1} parent=31 // pred_region
        %s654 = smul.u32 2, %s19
      $region36: #{quantizer_forward.1} parent=31 // pred_fallthru
        _
    $region32: #{quantizer_forward.1} parent=5 // pred_fallthru
      _
    %p655 = scmp.le.s32.totalorder 2, %s9
    // Predicated region
    $region37: #{quantizer_forward.1} parent=5 // pred_check
      %p656 = pneg %p655
    $region38: #{quantizer_forward.1} parent=5 // pred_check_branch
      %658 = sbr.rel (%p656) target = $region40
    $region39: #{quantizer_forward.1} parent=5 // pred_region
      %s659 = ssub.s32 %s9, 2
      // Predicated region
      $region41: #{quantizer_forward.1} parent=39 // pred_check
        %p660 = pneg %p122
      $region42: #{quantizer_forward.1} parent=39 // pred_check_branch
        %662 = sbr.rel (%p660) target = $region44
      $region43: #{quantizer_forward.1} parent=39 // pred_region
        %s663 = smul.u32 2, %s21
        %p664 = scmp.lt.s32.totalorder %s20, 1
        %s665 = scalar_select %p664, %s20, 1
        %p666 = scmp.lt.s32.totalorder %s663, 1
        %s667 = scalar_select %p666, %s663, 1
        %s668 = smul.addr %s665, 8
        %s669 = sadd.s32 %s667, %s668
        %s670 = smul.addr %s669, 8
        %s671 = scalar_lea.vmem %s3, %s670
      $region44: #{quantizer_forward.1} parent=39 // pred_fallthru
        _
    $region40: #{quantizer_forward.1} parent=5 // pred_fallthru
      _
  $region6: #{quantizer_forward.1} parent=0 // loop_footer
    %s13 = sadd.s32 1, %s9
  $region7: #{quantizer_forward.1} parent=0 // loop_footer_branch
    %8 = sbr.rel target = $region3
  $region8: #{quantizer_forward.1} parent=0 // loop_exit
    _

</llo_original>
